<compile_context>
chip_gen: v7x
topology: tpu7x:2x2x1
jax: 0.10.0
libtpu: 0.0.40
codegen_flags: <defaults>
</compile_context>

<pallas_src>
import jax
import jax.numpy as jnp
from jax.experimental import pallas as pl
from jax.experimental.pallas import tpu as pltpu


def _normalize_kernel(x_ref, mean_ref, inv_std_ref, o_ref):
    # y = (x - mean_c) * (1 / std_c); mean/inv_std are (BR, 1) and broadcast
    # along the lane-dense spatial axis. Pure VPU elementwise work.
    o_ref[...] = (x_ref[...] - mean_ref[...]) * inv_std_ref[...]


def _row_tile(rows):
    # Sublane-friendly row tile: a multiple of 8 that divides `rows`,
    # capped so the f32 block stays small; otherwise take the full extent
    # (legal because it equals the array dim).
    if rows % 8 != 0:
        return rows
    br = min(rows, 128)
    while rows % br != 0:
        br -= 8
    return br


def _col_tile(hw):
    # Lane-dense column tile: a multiple of 128 that divides H*W, capped at
    # 2048 f32 elements; otherwise take the full extent (legal: full dim).
    if hw % 128 != 0:
        return hw
    bc = min(hw, 2048)
    while hw % bc != 0:
        bc -= 128
    return bc


def sync_normalize(imgs, mean, std, normalize_masks=False):
    """imgs: (N, C, H, W) float array. Returns (N, C, H, W), normalized.

    Mirrors SyncNormalize.forward for a batch of same-shaped images.
    """
    # TODO(synk): a heterogeneous Python list of images (mixed channel counts /
    # shapes) has no single-kernel equivalent; batched NCHW input is assumed.
    N, C, H, W = imgs.shape
    mean = jnp.asarray(mean, dtype=imgs.dtype).reshape(-1)
    std = jnp.asarray(std, dtype=imgs.dtype).reshape(-1)

    if C > 1:
        ch_mean, ch_std = mean[:C], std[:C]
    elif normalize_masks:
        ch_mean, ch_std = mean[:1], std[:1]
    else:
        # Single-channel masks, normalization disabled: passthrough.
        return imgs

    rows = N * C
    hw = H * W
    x2 = imgs.reshape(rows, hw)                       # lane-dense layout, no transpose
    mean_rows = jnp.tile(ch_mean, N).reshape(rows, 1)  # row r -> channel r % C
    inv_std_rows = jnp.tile(1.0 / ch_std, N).reshape(rows, 1)

    br = _row_tile(rows)
    bc = _col_tile(hw)
    itemsize = jnp.dtype(imgs.dtype).itemsize

    y2 = pl.pallas_call(
        _normalize_kernel,
        out_shape=jax.ShapeDtypeStruct((rows, hw), imgs.dtype),
        grid=(rows // br, hw // bc),
        in_specs=[
            pl.BlockSpec((br, bc), lambda i, j: (i, j)),
            pl.BlockSpec((br, 1), lambda i, j: (i, 0)),
            pl.BlockSpec((br, 1), lambda i, j: (i, 0)),
        ],
        out_specs=pl.BlockSpec((br, bc), lambda i, j: (i, j)),
        compiler_params=pltpu.CompilerParams(
            dimension_semantics=("parallel", "parallel"),
        ),
        cost_estimate=pl.CostEstimate(
            flops=2 * rows * hw,
            transcendentals=0,
            bytes_accessed=2 * rows * hw * itemsize + 2 * rows * itemsize,
        ),
    )(x2, mean_rows, inv_std_rows)

    return y2.reshape(N, C, H, W)


if __name__ == "__main__":
    key = jax.random.PRNGKey(0)
    N, C, H, W = 2, 4, 16, 16
    x = jax.random.uniform(key, (N, C, H, W), dtype=jnp.float32)

    mean = [0.485, 0.456, 0.406, 0.5]
    std = [0.229, 0.224, 0.225, 0.25]

    # Multi-channel path.
    y = jax.block_until_ready(sync_normalize(x, mean, std))
    m = jnp.asarray(mean, jnp.float32)[None, :, None, None]
    s = jnp.asarray(std, jnp.float32)[None, :, None, None]
    ref = (x - m) / s
    assert y.shape == x.shape and y.dtype == x.dtype
    assert bool(jnp.allclose(y, ref, atol=1e-5, rtol=1e-5))

    # Single-channel mask, normalize_masks=False -> passthrough.
    masks = jax.random.uniform(jax.random.PRNGKey(1), (N, 1, H, W), dtype=jnp.float32)
    m_pass = sync_normalize(masks, mean, std, normalize_masks=False)
    assert bool(jnp.all(m_pass == masks))

    # Single-channel mask, normalize_masks=True -> normalize with mean[0]/std[0].
    m_norm = jax.block_until_ready(sync_normalize(masks, mean, std, normalize_masks=True))
    ref_m = (masks - mean[0]) / std[0]
    assert bool(jnp.allclose(m_norm, ref_m, atol=1e-5, rtol=1e-5))

    print("KERNEL_OK")
</pallas_src>

<mosaic_0001>
module attributes {stable_mosaic.version = 11 : i64} {
  func.func @_normalize_kernel(%arg0: i32, %arg1: i32, %arg2: memref<8x256xf32, #tpu.memory_space<vmem>>, %arg3: memref<8x1xf32, #tpu.memory_space<vmem>>, %arg4: memref<8x1xf32, #tpu.memory_space<vmem>>, %arg5: memref<8x256xf32, #tpu.memory_space<vmem>>) attributes {dimension_semantics = [#tpu.dimension_semantics<parallel>, #tpu.dimension_semantics<parallel>], iteration_bounds = array<i64: 1, 1>, scalar_prefetch = 0 : i64, scratch_operands = 0 : i64, tpu.core_type = #tpu.core_type<tc>, window_params = [{transform_indices = @transform_0, window_bounds = array<i64: 8, 256>}, {transform_indices = @transform_1, window_bounds = array<i64: 8, 1>}, {transform_indices = @transform_2, window_bounds = array<i64: 8, 1>}, {transform_indices = @transform_3, window_bounds = array<i64: 8, 256>}]} {
    %c0 = arith.constant 0 : index
    %c0_0 = arith.constant 0 : index
    %0 = vector.load %arg2[%c0, %c0_0] : memref<8x256xf32, #tpu.memory_space<vmem>>, vector<8x256xf32>
    %c0_1 = arith.constant 0 : index
    %c0_2 = arith.constant 0 : index
    %1 = vector.load %arg3[%c0_1, %c0_2] : memref<8x1xf32, #tpu.memory_space<vmem>>, vector<8x1xf32>
    %2 = vector.broadcast %1 : vector<8x1xf32> to vector<8x256xf32>
    %3 = arith.subf %0, %2 : vector<8x256xf32>
    %c0_3 = arith.constant 0 : index
    %c0_4 = arith.constant 0 : index
    %4 = vector.load %arg4[%c0_3, %c0_4] : memref<8x1xf32, #tpu.memory_space<vmem>>, vector<8x1xf32>
    %5 = vector.broadcast %4 : vector<8x1xf32> to vector<8x256xf32>
    %6 = arith.mulf %3, %5 : vector<8x256xf32>
    %c0_5 = arith.constant 0 : index
    %c0_6 = arith.constant 0 : index
    %7 = vector.load %arg5[%c0_5, %c0_6] : memref<8x256xf32, #tpu.memory_space<vmem>>, vector<8x256xf32>
    tpu.vector_store %arg5[%c0_5, %c0_6], %6 {strides = array<i32>} : memref<8x256xf32, #tpu.memory_space<vmem>>, vector<8x256xf32>,
    return
  }
  func.func @transform_0(%arg0: i32, %arg1: i32) -> (i32, i32) {
    %c0_i32 = arith.constant 0 : i32
    return %arg0, %arg1 : i32, i32
  }
  func.func @transform_1(%arg0: i32, %arg1: i32) -> (i32, i32) {
    %c0_i32 = arith.constant 0 : i32
    %c0_i32_0 = arith.constant 0 : i32
    return %arg0, %c0_i32 : i32, i32
  }
  func.func @transform_2(%arg0: i32, %arg1: i32) -> (i32, i32) {
    %c0_i32 = arith.constant 0 : i32
    %c0_i32_0 = arith.constant 0 : i32
    return %arg0, %c0_i32 : i32, i32
  }
  func.func @transform_3(%arg0: i32, %arg1: i32) -> (i32, i32) {
    %c0_i32 = arith.constant 0 : i32
    return %arg0, %arg1 : i32, i32
  }
}

</mosaic_0001>

<llo_original>
// kernel: tpu_custom_call.1
$region0: #{tpu_custom_call.1}
  #allocation0 [shape = 'u32[]', space=smem, size = 0x4, offset = 0x4, fixed_abs, tag = 'smem constant byte address 0x4 - core index']
  #allocation1 [shape = 'u32[144,128]{1,0:T(1,128)}', space=vmem, size = 0x12000, scoped, tag = 'internal scratch']
  %s0 = inlined_call_operand.vmem [shape: f32[8,256], index: 0, kind: input, shape index: {}]
  %s1 = inlined_call_operand.vmem [shape: f32[8,1], index: 1, kind: input, shape index: {}]
  %s2 = inlined_call_operand.vmem [shape: f32[8,1], index: 2, kind: input, shape index: {}]
  %s3 = inlined_call_operand.hbm [shape: f32[8,256], index: 3, kind: output, shape index: {}]
  %s4 = sld [smem:[#allocation0]]
  $region22: #{tpu_custom_call.1} parent=0
    _
  %s6 = ssub.s32 1, %s4
  %s7 = scalar_select 0, %s6, %s4
  $region1: #{tpu_custom_call.1} parent=0
    #allocation2 [shape = 'u8[8192]{0}', space=vmem, size = 0x2000, scoped, tag = 'output window, operand 0, single buffered']
    #allocation3 [shape = 's32[1]{0}', space=sflag, size = 0x4, scoped, tag = 'scoped memory for tpu_custom_call.1']
    %8 = vsyncpa [#allocation3], 0
    // Predicated region
    $region2: #{tpu_custom_call.1} parent=1 // pred_check
      _
    $region3: #{tpu_custom_call.1} parent=1 // pred_check_branch
      %10 = sbr.rel (0) target = $region5
    $region4: #{tpu_custom_call.1} parent=1 // pred_region
      _
    $region5: #{tpu_custom_call.1} parent=1 // pred_fallthru
      _
    // Predicated region
    $region6: #{tpu_custom_call.1} parent=1 // pred_check
      _
    $region7: #{tpu_custom_call.1} parent=1 // pred_check_branch
      %12 = sbr.rel (0) target = $region9
    $region8: #{tpu_custom_call.1} parent=1 // pred_region
      _
    $region9: #{tpu_custom_call.1} parent=1 // pred_fallthru
      _
    // Predicated region
    $region10: #{tpu_custom_call.1} parent=1 // pred_check
      _
    $region11: #{tpu_custom_call.1} parent=1 // pred_check_branch
      %14 = sbr.rel (0) target = $region13
    $region12: #{tpu_custom_call.1} parent=1 // pred_region
      _
    $region13: #{tpu_custom_call.1} parent=1 // pred_fallthru
      _
    %v15 = vld [vmem:[%s0] sm:$0xff]
    %v16 = vld [vmem:[%s0 + $0x8] sm:$0xff]
    %v17 = vld [vmem:[%s1] sm:$0xff]
    %19 = vset.pattern.permute.xlu0 0
    %20 = vperm.xlu0 %19, %v17
    %v21 = vpop.permute.xlu0 %20
    %v23 = vsub.f32 %v15, %v21
    %v24 = vsub.f32 %v16, %v21
    %v25 = vld [vmem:[%s2] sm:$0xff]
    %27 = vset.pattern.permute.xlu0 0
    %28 = vperm.xlu0 %27, %v25
    %v29 = vpop.permute.xlu0 %28
    %v31 = vmul.f32 %v23, %v29
    %v32 = vmul.f32 %v24, %v29
    %33 = vst [vmem:[#allocation2] sm:$0xff] %v31
    %34 = vst [vmem:[#allocation2 + $0x8] sm:$0xff] %v32
    // Predicated region
    $region14: #{tpu_custom_call.1} parent=1 // pred_check
      _
    $region15: #{tpu_custom_call.1} parent=1 // pred_check_branch
      %36 = sbr.rel (0) target = $region17
    $region16: #{tpu_custom_call.1} parent=1 // pred_region
      %s38 = ssub.s32 256, 256
      %39 = vsyncadd [#allocation3], %s38
      %s41 = sshll.u32 [#allocation2], 4
      %s42 = int_to_ptr.vmem [resolvable:$true] %s41
      %44 = dma.vmem_to_hbm [thread:$0]  %s42, 256, %s3, [#allocation3]
    $region17: #{tpu_custom_call.1} parent=1 // pred_fallthru
      _
    // Predicated region
    $region18: #{tpu_custom_call.1} parent=1 // pred_check
      _
    $region19: #{tpu_custom_call.1} parent=1 // pred_check_branch
      %46 = sbr.rel (0) target = $region21
    $region20: #{tpu_custom_call.1} parent=1 // pred_region
      %47 = dma.done [#allocation3], 256
    $region21: #{tpu_custom_call.1} parent=1 // pred_fallthru
      _
    %48 = vsyncpa [#allocation3], 1

</llo_original>
